<compile_context>
chip_gen: v7x
topology: tpu7x:2x2x1
jax: 0.10.0
libtpu: 0.0.40
codegen_flags: <defaults>
</compile_context>

<pallas_src>
import jax
import jax.numpy as jnp
from jax.experimental import pallas as pl
from jax.experimental.pallas import tpu as pltpu


# ----------------------------------------------------------------------------
# Pallas identity copy: one whole-array HBM -> HBM DMA.
# ----------------------------------------------------------------------------

def _dma_copy_kernel(x_hbm_ref, o_hbm_ref, sem):
    copy = pltpu.make_async_copy(x_hbm_ref, o_hbm_ref, sem)
    copy.start()
    copy.wait()


def _pallas_identity(x):
    """Fresh device copy of `x` via a single HBM->HBM DMA inside a Pallas call."""
    nbytes = x.size * jnp.dtype(x.dtype).itemsize
    return pl.pallas_call(
        _dma_copy_kernel,
        out_shape=jax.ShapeDtypeStruct(x.shape, x.dtype),
        in_specs=[pl.BlockSpec(memory_space=pl.ANY)],   # raw HBM ref, no auto-DMA
        out_specs=pl.BlockSpec(memory_space=pl.ANY),    # raw HBM ref, no auto-DMA
        scratch_shapes=[pltpu.SemaphoreType.DMA(())],
        cost_estimate=pl.CostEstimate(
            flops=0, transcendentals=0, bytes_accessed=2 * nbytes
        ),
    )(x)


# ----------------------------------------------------------------------------
# NoPool forward
# ----------------------------------------------------------------------------

def no_pool(x, x_score, edge_index, edge_attr=None, batch=None, *, copy_x=False):
    """JAX/Pallas equivalent of NoPool.forward.

    Returns (x, edge_index, edge_attr, batch); x_score is ignored, matching the
    PyTorch reference exactly. Default path is a true no-op (no kernel, no HBM
    traffic). copy_x=True always returns a fresh device copy of x produced by a
    single HBM->HBM DMA Pallas kernel.
    """
    del x_score  # dropped by the reference implementation
    if copy_x:
        x = _pallas_identity(x)
    # edge_index / edge_attr / batch are metadata -> passed through unchanged.
    return (x, edge_index, edge_attr, batch)


if __name__ == "__main__":
    key = jax.random.PRNGKey(0)
    k1, k2, k3, k4, k5 = jax.random.split(key, 5)

    # Small graph: 8 nodes, 32 features, 16 edges, 4-dim edge attributes, 2 graphs.
    num_nodes, num_feats, num_edges, edge_dim = 8, 32, 16, 4

    x = jax.random.normal(k1, (num_nodes, num_feats), dtype=jnp.float32)
    x_score = jax.random.normal(k2, (num_nodes,), dtype=jnp.float32)
    edge_index = jax.random.randint(k3, (2, num_edges), 0, num_nodes, dtype=jnp.int32)
    edge_attr = jax.random.normal(k4, (num_edges, edge_dim), dtype=jnp.float32)
    batch = jnp.concatenate(
        [jnp.zeros((num_nodes // 2,), jnp.int32), jnp.ones((num_nodes // 2,), jnp.int32)]
    )

    # --- Default (optimized) path: pure pass-through, no kernel launched. ---
    x_out, ei_out, ea_out, b_out = no_pool(x, x_score, edge_index, edge_attr, batch)
    jax.block_until_ready((x_out, ei_out, ea_out, b_out))
    assert x_out.shape == x.shape and x_out.dtype == x.dtype
    assert bool(jnp.array_equal(x_out, x))
    assert bool(jnp.array_equal(ei_out, edge_index))
    assert bool(jnp.array_equal(ea_out, edge_attr))
    assert bool(jnp.array_equal(b_out, batch))

    # --- Optional None metadata path. ---
    x_out2, ei_out2, ea_out2, b_out2 = no_pool(x, x_score, edge_index)
    assert ea_out2 is None and b_out2 is None
    assert bool(jnp.array_equal(x_out2, x))

    # --- copy_x=True path: single HBM->HBM DMA copy (small, odd-shaped input). ---
    x_copy, _, _, _ = no_pool(x, x_score, edge_index, edge_attr, batch, copy_x=True)
    jax.block_until_ready(x_copy)
    assert x_copy.shape == x.shape and x_copy.dtype == x.dtype
    assert bool(jnp.array_equal(x_copy, x))

    # --- Exercise the DMA copy on a larger, non-128-aligned shape too. ---
    x_big = jax.random.normal(k5, (2056, 384), dtype=jnp.float32)
    x_big_copy = _pallas_identity(x_big)
    jax.block_until_ready(x_big_copy)
    assert x_big_copy.shape == x_big.shape and x_big_copy.dtype == x_big.dtype
    assert bool(jnp.array_equal(x_big_copy, x_big))

    print("KERNEL_OK")
</pallas_src>

<mosaic_0001>
module attributes {stable_mosaic.version = 11 : i64} {
  func.func @_dma_copy_kernel(%arg0: memref<8x32xf32, #tpu.memory_space<any>>, %arg1: memref<8x32xf32, #tpu.memory_space<any>>, %arg2: memref<!tpu.dma_semaphore, #tpu.memory_space<semaphore_mem>>) attributes {dimension_semantics = [], scalar_prefetch = 0 : i64, scratch_operands = 1 : i64, tpu.core_type = #tpu.core_type<tc>} {
    tpu.enqueue_dma source(%arg0 : memref<8x32xf32, #tpu.memory_space<any>>) target(%arg1 : memref<8x32xf32, #tpu.memory_space<any>>) target_semaphore(%arg2 : memref<!tpu.dma_semaphore, #tpu.memory_space<semaphore_mem>>)
    tpu.wait_dma2 semaphore(%arg2 : memref<!tpu.dma_semaphore, #tpu.memory_space<semaphore_mem>>) src(%arg0 : memref<8x32xf32, #tpu.memory_space<any>>) dst(%arg1 : memref<8x32xf32, #tpu.memory_space<any>>)
    return
  }
}

</mosaic_0001>

<llo_original>
// kernel: tpu_custom_call.1
$region0: #{tpu_custom_call.1}
  #allocation0 [shape = 'u32[]', space=smem, size = 0x4, offset = 0x4, fixed_abs, tag = 'smem constant byte address 0x4 - core index']
  #allocation1 [shape = 'u32[144,128]{1,0:T(1,128)}', space=vmem, size = 0x12000, scoped, tag = 'internal scratch']
  #allocation2 [shape = 's32[1]{0}', space=sflag, size = 0x4, scoped, tag = 'scratch operand']
  #allocation3 [shape = 's32[]', space=sflag, size = 0x4, offset = 0, fixed_abs, tag = 'sflag constant byte address 0x0 - dummy sync flag']
  #allocation4 [shape = 'u32[0]{0}', space=smem, size = 0, offset = 0, fixed_abs, tag = 'smem constant byte address 0x0 - null']
  %s0 = inlined_call_operand.hbm [shape: f32[8,32], index: 0, kind: input, shape index: {}]
  %s1 = inlined_call_operand.hbm [shape: f32[8,32], index: 1, kind: output, shape index: {}]
  %s2 = sld [smem:[#allocation0]]
  $region2: #{tpu_custom_call.1} parent=0
    _
  %s4 = ssub.s32 1, %s2
  %s5 = scalar_select 0, %s4, %s2
  %s7 = sshll.u32 1, 14
  %s8 = sxor.u32 4294967295, %s7
  %s11 = sshll.u32 3, 24
  %s12 = sxor.u32 4294967295, %s11
  %s13 = sand.u32 0, %s12
  %s15 = sor.u32 %s13, 0
  %18 = dma.general %s0, 128, %s1, [#allocation2], [#allocation3], [#allocation4], %s15, 0
  %s19 = smul.u32 8, 1
  %s20 = sshll.u32 %s19, 4
  %21 = dma.done [#allocation2], %s20
  %22 = vsyncmov [#allocation2]
  %s23 = vpop.sfrf %22
  %p24 = scmp.eq.s32.totalorder %s23, 0
  %p25 = pneg %p24
  %27 = shalt.err (%p25)

</llo_original>
